<compile_context>
chip_gen: v6e
topology: v6e:2x2x1
jax: 0.10.0
libtpu: 0.0.40
codegen_flags: <defaults>
</compile_context>

<pallas_src>
import functools
import math

import jax
import jax.numpy as jnp
from jax.experimental import pallas as pl
from jax.experimental.pallas import tpu as pltpu


def _layernorm_kernel_noaffine(x_ref, o_ref, *, eps: float, d_model: int):
    # Default-parameter path (alpha = 1, bias = 0): skip the mul/add.
    x = x_ref[...].astype(jnp.float32)
    mean = jnp.mean(x, axis=-1, keepdims=True)
    xc = x - mean
    # PyTorch x.std() defaults to the unbiased estimator (divide by N-1).
    var = jnp.sum(xc * xc, axis=-1, keepdims=True) * (1.0 / float(d_model - 1))
    std = jnp.sqrt(var)
    inv = 1.0 / (std + eps)            # per-row (TM,1) reciprocal: D x less EUP work
    o_ref[...] = (xc * inv).astype(o_ref.dtype)


def _layernorm_kernel_affine(x_ref, alpha_ref, bias_ref, o_ref, *, eps: float,
                             d_model: int):
    x = x_ref[...].astype(jnp.float32)
    mean = jnp.mean(x, axis=-1, keepdims=True)
    xc = x - mean
    var = jnp.sum(xc * xc, axis=-1, keepdims=True) * (1.0 / float(d_model - 1))
    std = jnp.sqrt(var)
    inv = 1.0 / (std + eps)            # per-row reciprocal, not per-element divide
    y = alpha_ref[...] * (xc * inv) + bias_ref[...]
    o_ref[...] = y.astype(o_ref.dtype)


def _choose_row_tile(n_rows: int, d_model: int) -> int:
    """Sublane-dense (multiple of 8) row tile, budgeted in f32 units (~4 MiB)."""
    budget_bytes = 4 * 1024 * 1024          # per-tile budget, in f32 terms so the
    tm = budget_bytes // max(1, d_model * 4)  # in-kernel f32 intermediates fit too
    tm = max(8, min(2048, tm))
    tm -= tm % 8
    tm = max(8, tm)
    # Never ask for a tile taller than the (8-rounded-up) row count.
    n_rows_r8 = ((n_rows + 7) // 8) * 8
    return min(tm, n_rows_r8)


def layer_norm_lastdim(x: jax.Array, alpha=None, bias=None,
                       eps: float = 1e-6) -> jax.Array:
    """Pallas implementation of LayerNormalization.forward (last-dim norm)."""
    orig_shape = x.shape
    d_model = orig_shape[-1]
    n_rows = int(math.prod(orig_shape[:-1])) if len(orig_shape) > 1 else 1

    x2 = x.reshape(n_rows, d_model)
    tm = _choose_row_tile(n_rows, d_model)
    grid = (pl.cdiv(n_rows, tm),)

    # Explicit scoped-VMEM budget: double-buffered in + out, plus an allowance
    # for f32 intermediates, plus slack.  Portable across v5e/v6e/v7x.
    tile_in_bytes = tm * d_model * x.dtype.itemsize
    tile_f32_bytes = tm * d_model * 4
    vmem_limit = 4 * tile_in_bytes + 4 * tile_f32_bytes + (2 << 20)
    vmem_limit = int(min(max(vmem_limit, 16 << 20), 48 << 20))

    cparams = pltpu.CompilerParams(
        # Independent row tiles -> shard the grid across v7x's two TensorCores.
        dimension_semantics=("parallel",),
        vmem_limit_bytes=vmem_limit,
    )

    has_affine = (alpha is not None) or (bias is not None)

    if has_affine:
        if alpha is None:
            alpha = jnp.ones((d_model,), dtype=jnp.float32)
        if bias is None:
            bias = jnp.zeros((d_model,), dtype=jnp.float32)
        alpha2 = jnp.asarray(alpha).reshape(1, d_model).astype(jnp.float32)
        bias2 = jnp.asarray(bias).reshape(1, d_model).astype(jnp.float32)
        kernel = functools.partial(_layernorm_kernel_affine, eps=eps,
                                   d_model=d_model)
        out2 = pl.pallas_call(
            kernel,
            out_shape=jax.ShapeDtypeStruct((n_rows, d_model), x.dtype),
            grid_spec=pltpu.PrefetchScalarGridSpec(
                num_scalar_prefetch=0,
                grid=grid,
                in_specs=[
                    pl.BlockSpec((tm, d_model), lambda i: (i, 0)),   # x row tile
                    pl.BlockSpec((1, d_model), lambda i: (0, 0)),    # alpha (resident)
                    pl.BlockSpec((1, d_model), lambda i: (0, 0)),    # bias  (resident)
                ],
                out_specs=pl.BlockSpec((tm, d_model), lambda i: (i, 0)),
            ),
            compiler_params=cparams,
        )(x2, alpha2, bias2)
    else:
        kernel = functools.partial(_layernorm_kernel_noaffine, eps=eps,
                                   d_model=d_model)
        out2 = pl.pallas_call(
            kernel,
            out_shape=jax.ShapeDtypeStruct((n_rows, d_model), x.dtype),
            grid_spec=pltpu.PrefetchScalarGridSpec(
                num_scalar_prefetch=0,
                grid=grid,
                in_specs=[pl.BlockSpec((tm, d_model), lambda i: (i, 0))],
                out_specs=pl.BlockSpec((tm, d_model), lambda i: (i, 0)),
            ),
            compiler_params=cparams,
        )(x2)

    return out2.reshape(orig_shape)


def decoder_forward(x, encoder_output, src_mask, tgt_mask, layers=(),
                    alpha=None, bias=None, eps: float = 1e-6):
    """Equivalent of Decoder.forward: apply layers, then LayerNormalization."""
    # TODO(synk): Decoder.layers is an arbitrary nn.ModuleList supplied at
    # construction time with no definition in this spec; any user-provided JAX
    # callables with signature layer(x, encoder_output, src_mask, tgt_mask) are
    # applied here (empty by default => pass-through, matching layers=[]).
    for layer in layers:
        x = layer(x, encoder_output, src_mask, tgt_mask)
    # alpha/bias None == lazily created ones/zeros parameters (default path).
    return layer_norm_lastdim(x, alpha=alpha, bias=bias, eps=eps)


def _reference_decoder(x, alpha=None, bias=None, eps=1e-6):
    mean = x.mean(axis=-1, keepdims=True)
    std = jnp.std(x, axis=-1, keepdims=True, ddof=1)  # unbiased, like torch.std
    y = (x - mean) / (std + eps)
    if alpha is not None:
        y = alpha * y
    if bias is not None:
        y = y + bias
    return y


if __name__ == "__main__":
    batch, seq, d_model = 2, 8, 128
    key = jax.random.PRNGKey(0)
    kx, ke, kx2, ka, kb = jax.random.split(key, 5)

    x = jax.random.normal(kx, (batch, seq, d_model), dtype=jnp.float32)
    encoder_output = jax.random.normal(ke, (batch, seq, d_model), dtype=jnp.float32)
    src_mask = jnp.ones((batch, 1, 1, seq), dtype=jnp.float32)
    tgt_mask = jnp.tril(jnp.ones((seq, seq), dtype=jnp.float32))[None, None, :, :]

    # Default (lazy ones/zeros parameters) path.
    out = decoder_forward(x, encoder_output, src_mask, tgt_mask)
    out = jax.block_until_ready(out)
    ref = _reference_decoder(x)
    assert out.shape == x.shape
    assert jnp.allclose(out, ref, atol=1e-5, rtol=1e-5)

    # Row count (3*5=15) not a multiple of 8 -> exercises the masked
    # partial-last-block path (no full-array fallback anymore).
    x_odd = jax.random.normal(kx2, (3, 5, d_model), dtype=jnp.float32)
    out_odd = jax.block_until_ready(
        decoder_forward(x_odd, encoder_output, src_mask, tgt_mask)
    )
    assert jnp.allclose(out_odd, _reference_decoder(x_odd), atol=1e-5, rtol=1e-5)

    # Explicit (non-default) alpha/bias path.
    alpha = jax.random.normal(ka, (d_model,), dtype=jnp.float32)
    bias = jax.random.normal(kb, (d_model,), dtype=jnp.float32)
    out_aff = jax.block_until_ready(
        decoder_forward(x, encoder_output, src_mask, tgt_mask,
                        alpha=alpha, bias=bias)
    )
    assert jnp.allclose(out_aff, _reference_decoder(x, alpha, bias),
                        atol=1e-5, rtol=1e-5)

    print("KERNEL_OK")
</pallas_src>

<mosaic_0001>
module attributes {stable_mosaic.version = 11 : i64} {
  func.func @_layernorm_kernel_noaffine(%arg0: i32, %arg1: memref<16x128xf32, #tpu.memory_space<vmem>>, %arg2: memref<16x128xf32, #tpu.memory_space<vmem>>) attributes {dimension_semantics = [#tpu.dimension_semantics<parallel>], iteration_bounds = array<i64: 1>, scalar_prefetch = 0 : i64, scratch_operands = 0 : i64, tpu.core_type = #tpu.core_type<tc>, window_params = [{transform_indices = @transform_0, window_bounds = array<i64: 16, 128>}, {transform_indices = @transform_1, window_bounds = array<i64: 16, 128>}]} {
    %c0 = arith.constant 0 : index
    %c0_0 = arith.constant 0 : index
    %0 = vector.load %arg1[%c0, %c0_0] : memref<16x128xf32, #tpu.memory_space<vmem>>, vector<16x128xf32>
    %cst = arith.constant dense<0.000000e+00> : vector<16xf32>
    %1 = vector.multi_reduction <add>, %0, %cst [1] : vector<16x128xf32> to vector<16xf32>
    %2 = vector.shape_cast %1 : vector<16xf32> to vector<16x1xf32>
    %cst_1 = arith.constant 1.280000e+02 : f32
    %3 = vector.broadcast %cst_1 : f32 to vector<16x1xf32>
    %4 = arith.divf %2, %3 : vector<16x1xf32>
    %5 = vector.broadcast %4 : vector<16x1xf32> to vector<16x128xf32>
    %6 = arith.subf %0, %5 : vector<16x128xf32>
    %7 = arith.mulf %6, %6 : vector<16x128xf32>
    %cst_2 = arith.constant dense<0.000000e+00> : vector<16xf32>
    %8 = vector.multi_reduction <add>, %7, %cst_2 [1] : vector<16x128xf32> to vector<16xf32>
    %9 = vector.shape_cast %8 : vector<16xf32> to vector<16x1xf32>
    %cst_3 = arith.constant 0.00787401571 : f32
    %10 = vector.broadcast %cst_3 : f32 to vector<16x1xf32>
    %11 = arith.mulf %9, %10 : vector<16x1xf32>
    %12 = math.sqrt %11 : vector<16x1xf32>
    %cst_4 = arith.constant 9.99999997E-7 : f32
    %13 = vector.broadcast %cst_4 : f32 to vector<16x1xf32>
    %14 = arith.addf %12, %13 : vector<16x1xf32>
    %cst_5 = arith.constant 1.000000e+00 : f32
    %15 = vector.broadcast %cst_5 : f32 to vector<16x1xf32>
    %16 = arith.divf %15, %14 : vector<16x1xf32>
    %17 = vector.broadcast %16 : vector<16x1xf32> to vector<16x128xf32>
    %18 = arith.mulf %6, %17 : vector<16x128xf32>
    %c0_6 = arith.constant 0 : index
    %c0_7 = arith.constant 0 : index
    %19 = vector.load %arg2[%c0_6, %c0_7] : memref<16x128xf32, #tpu.memory_space<vmem>>, vector<16x128xf32>
    tpu.vector_store %arg2[%c0_6, %c0_7], %18 {strides = array<i32>} : memref<16x128xf32, #tpu.memory_space<vmem>>, vector<16x128xf32>,
    return
  }
  func.func @transform_0(%arg0: i32) -> (i32, i32) {
    %c0_i32 = arith.constant 0 : i32
    %c0_i32_0 = arith.constant 0 : i32
    return %arg0, %c0_i32 : i32, i32
  }
  func.func @transform_1(%arg0: i32) -> (i32, i32) {
    %c0_i32 = arith.constant 0 : i32
    %c0_i32_0 = arith.constant 0 : i32
    return %arg0, %c0_i32 : i32, i32
  }
}

</mosaic_0001>

<llo_original>
// kernel: tpu_custom_call.1
$region0: #{tpu_custom_call.1}
  #allocation0 [shape = 'u32[]', space=smem, size = 0x4, offset = 0x4, fixed_abs, tag = 'smem constant byte address 0x4 - core index']
  #allocation1 [shape = 'u32[144,128]{1,0:T(1,128)}', space=vmem, size = 0x12000, scoped, tag = 'internal scratch']
  %s0 = inlined_call_operand.hbm [shape: f32[16,128], index: 0, kind: input, shape index: {}]
  %s1 = inlined_call_operand.hbm [shape: f32[16,128], index: 1, kind: output, shape index: {}]
  %s2 = sld [smem:[#allocation0]]
  $region18: #{tpu_custom_call.1} parent=0
    _
  %s4 = ssub.s32 1, %s2
  %s5 = scalar_select 0, %s4, %s2
  $region1: #{tpu_custom_call.1} parent=0
    #allocation2 [shape = 'u8[8192]{0}', space=vmem, size = 0x2000, scoped, tag = 'input window, operand 0, single buffered']
    #allocation3 [shape = 's32[1]{0}', space=sflag, size = 0x4, scoped, tag = 'scoped memory for tpu_custom_call.1']
    #allocation4 [shape = 's32[1]{0}', space=sflag, size = 0x4, scoped, tag = 'scoped memory for tpu_custom_call.1']
    #allocation5 [shape = 'u8[8192]{0}', space=vmem, size = 0x2000, scoped, tag = 'output window, operand 0, single buffered']
    %6 = vsyncpa [#allocation3], 0
    %7 = vsyncpa [#allocation4], 0
    // Predicated region
    $region2: #{tpu_custom_call.1} parent=1 // pred_check
      _
    $region3: #{tpu_custom_call.1} parent=1 // pred_check_branch
      %9 = sbr.rel (0) target = $region5
    $region4: #{tpu_custom_call.1} parent=1 // pred_region
      %s11 = ssub.s32 256, 256
      %12 = vsyncadd [#allocation3], %s11
      %s13 = sshll.u32 [#allocation2], 4
      %s14 = int_to_ptr.vmem [resolvable:$true] %s13
      %19 = dma.hbm_to_vmem [thread:$0]  %s0, 256, %s14, [#allocation3], 128, 128, 8
    $region5: #{tpu_custom_call.1} parent=1 // pred_fallthru
      _
    // Predicated region
    $region6: #{tpu_custom_call.1} parent=1 // pred_check
      _
    $region7: #{tpu_custom_call.1} parent=1 // pred_check_branch
      %21 = sbr.rel (0) target = $region9
    $region8: #{tpu_custom_call.1} parent=1 // pred_region
      %22 = dma.done [#allocation3], 256
    $region9: #{tpu_custom_call.1} parent=1 // pred_fallthru
      _
    %v23 = vld [vmem:[#allocation2] sm:$0xff]
    %v24 = vld [vmem:[#allocation2 + $0x8] sm:$0xff]
    %25 = vadd.xlane.f32.xlu0 %v23
    %v26 = vpop.xlane.xlu0 %25
    %27 = vadd.xlane.f32.xlu0 %v24
    %v28 = vpop.xlane.xlu0 %27
    %v29 = vrcp.pop 128.0
    %v30 = vmul.f32 %v26, %v29
    %v31 = vmul.f32 %v28, %v29
    %v32 = vsub.f32 %v23, %v30
    %v33 = vsub.f32 %v24, %v31
    %v34 = vmul.f32 %v32, %v32
    %v35 = vmul.f32 %v33, %v33
    %36 = vadd.xlane.f32.xlu0 %v34
    %v37 = vpop.xlane.xlu0 %36
    %38 = vadd.xlane.f32.xlu0 %v35
    %v39 = vpop.xlane.xlu0 %38
    %v40 = vmul.f32 %v37, 0.007874016
    %v41 = vmul.f32 %v39, 0.007874016
    %v42 = vrsqrt.pop %v40
    %v43 = vmul.f32 %v40, %v42
    %vm44 = vcmp.eq.f32.partialorder %v40, inf
    %v45 = vsel %vm44, %v40, %v43
    %vm46 = vcmp.eq.f32.partialorder %v40, 0.0
    %v47 = vand.u32 %v40, 2147483648
    %v48 = vsel %vm46, %v47, %v45
    %v49 = vrsqrt.pop %v41
    %v50 = vmul.f32 %v41, %v49
    %vm51 = vcmp.eq.f32.partialorder %v41, inf
    %v52 = vsel %vm51, %v41, %v50
    %vm53 = vcmp.eq.f32.partialorder %v41, 0.0
    %v54 = vand.u32 %v41, 2147483648
    %v55 = vsel %vm53, %v54, %v52
    %v56 = vadd.f32 %v48, 1e-06
    %v57 = vadd.f32 %v55, 1e-06
    %v58 = vrcp.pop %v56
    %v59 = vmul.f32 1.0, %v58
    %v60 = vrcp.pop %v57
    %v61 = vmul.f32 1.0, %v60
    %v62 = vmul.f32 %v32, %v59
    %v63 = vmul.f32 %v33, %v61
    %64 = vst [vmem:[#allocation5] sm:$0xff] %v62
    %65 = vst [vmem:[#allocation5 + $0x8] sm:$0xff] %v63
    // Predicated region
    $region10: #{tpu_custom_call.1} parent=1 // pred_check
      _
    $region11: #{tpu_custom_call.1} parent=1 // pred_check_branch
      %67 = sbr.rel (0) target = $region13
    $region12: #{tpu_custom_call.1} parent=1 // pred_region
      %s69 = ssub.s32 256, 256
      %70 = vsyncadd [#allocation4], %s69
      %s71 = sshll.u32 [#allocation5], 4
      %s72 = int_to_ptr.vmem [resolvable:$true] %s71
      %77 = dma.vmem_to_hbm [thread:$0]  %s72, 256, %s1, [#allocation4], 128, 128, 8
    $region13: #{tpu_custom_call.1} parent=1 // pred_fallthru
      _
    // Predicated region
    $region14: #{tpu_custom_call.1} parent=1 // pred_check
      _
    $region15: #{tpu_custom_call.1} parent=1 // pred_check_branch
      %79 = sbr.rel (0) target = $region17
    $region16: #{tpu_custom_call.1} parent=1 // pred_region
      %80 = dma.done [#allocation4], 256
    $region17: #{tpu_custom_call.1} parent=1 // pred_fallthru
      _
    %81 = vsyncpa [#allocation3], 1
    %82 = vsyncpa [#allocation4], 1

</llo_original>
